<compile_context>
chip_gen: v6e
topology: v6e:2x2x1
jax: 0.10.0
libtpu: 0.0.40
codegen_flags: <defaults>
</compile_context>

<pallas_src>
import numpy as np
import jax
import jax.numpy as jnp
from jax.experimental import pallas as pl
from jax.experimental.pallas import tpu as pltpu

# ---------------------------- model configuration ----------------------------
N_CENTERS = [9, 16, 25]          # perfect squares (module builds sqrt(n) x sqrt(n) knot grids)
OUT_DIM = int(np.sum(N_CENTERS)) # 50
N_LAYERS = 3                     # number of hidden Linear(n_neurons, n_neurons) layers
N_NEURONS = 32
BATCH = 256                      # small demo batch (2 lane-dense tiles of 128)


def build_centers(n_centers):
    """Replicates RBF.__init__ centers buffer (meshgrid 'ij', column_stack)."""
    blocks = []
    for nc in n_centers:
        k = np.linspace(0.0, 1.0, int(np.sqrt(nc)), dtype=np.float32)
        s1, s2 = np.meshgrid(k, k, indexing="ij")
        blocks.append(np.column_stack((s1.flatten(), s2.flatten())))
    return np.concatenate(blocks, axis=0).astype(np.float32)  # (OUT_DIM, 2)


# --------------------------------- kernel ------------------------------------
def rbf_network_kernel(x_ref, c_ref, w0_ref, b0_ref, wh_ref, bh_ref,
                       wo_ref, bo_ref, o_ref):
    # Transposed dataflow: batch on lanes.
    x = x_ref[...]                        # (2, TILE_N)
    cx = c_ref[:, 0:1]                    # (C, 1)
    cy = c_ref[:, 1:2]                    # (C, 1)

    # RBF layer: pairwise distances between centers (sublanes) and points (lanes).
    dx = cx - x[0:1, :]                   # (C, TILE_N)
    dy = cy - x[1:2, :]                   # (C, TILE_N)
    d = jnp.sqrt(dx * dx + dy * dy)       # torch.norm(x - centers, dim=2)

    # (1 - d)^6 * (35 d^2 + 18 d + 3) / 3  -- Horner form, 1/3 folded in.
    t = 1.0 - d
    t2 = t * t
    t6 = t2 * t2 * t2
    h = t6 * (d * ((35.0 / 3.0) * d + 6.0) + 1.0)          # (C, TILE_N), f32

    # fc_hidden_layer + ReLU:  W0 (32, 50) @ h (50, TILE_N)
    h = jnp.maximum(
        jnp.dot(w0_ref[...], h, preferred_element_type=jnp.float32) + b0_ref[...],
        0.0)                                                # (32, TILE_N)

    # hidden layers (+ ReLU), statically unrolled
    for l in range(N_LAYERS):
        h = jnp.maximum(
            jnp.dot(wh_ref[l], h, preferred_element_type=jnp.float32) + bh_ref[l],
            0.0)

    # output layer (32 -> 1): VPU multiply + sublane reduction (no MXU pass).
    o_ref[...] = jnp.sum(h * wo_ref[...], axis=0, keepdims=True) + bo_ref[0, 0]


# -------------------------------- wrapper ------------------------------------
def _pick_tile(n):
    # Lane-dense batch tiles (multiple of 128), as large as possible while
    # keeping >= 2 grid steps so both v7x TensorCores get work; otherwise a
    # single step covering the full batch.
    for t in (2048, 1024, 512, 256, 128):
        if n % t == 0 and n // t >= 2:
            return t
    return n


def rbf_network(x, centers, w0, b0, wh, bh, wo, bo):
    """x: (N, 2) f32.  Params in PyTorch layout:
    w0 (32, 50), b0 (32,), wh (L, 32, 32), bh (L, 32), wo (1, 32), bo (1,).
    Returns (N, 1) f32."""
    n = x.shape[0]
    tile = _pick_tile(n)
    assert n % tile == 0
    grid = (n // tile,)

    xt = x.T                                   # (2, N): batch on lanes, contiguous DMA
    b0c = b0.reshape(N_NEURONS, 1)             # column biases broadcast over lanes
    bhc = bh.reshape(N_LAYERS, N_NEURONS, 1)
    woc = wo.T                                 # (32, 1) column for the VPU reduction
    boc = bo.reshape(1, 1)                     # scalar, lives in SMEM

    out = pl.pallas_call(
        rbf_network_kernel,
        out_shape=jax.ShapeDtypeStruct((1, n), jnp.float32),
        grid_spec=pltpu.PrefetchScalarGridSpec(
            num_scalar_prefetch=0,
            grid=grid,
            in_specs=[
                pl.BlockSpec((2, tile), lambda i: (0, i)),                    # x^T tile
                pl.BlockSpec((OUT_DIM, 2), lambda i: (0, 0)),                 # centers
                pl.BlockSpec((N_NEURONS, OUT_DIM), lambda i: (0, 0)),         # W0 (out,in)
                pl.BlockSpec((N_NEURONS, 1), lambda i: (0, 0)),               # b0 column
                pl.BlockSpec((N_LAYERS, N_NEURONS, N_NEURONS),
                             lambda i: (0, 0, 0)),                            # hidden Ws
                pl.BlockSpec((N_LAYERS, N_NEURONS, 1), lambda i: (0, 0, 0)),  # hidden bs
                pl.BlockSpec((N_NEURONS, 1), lambda i: (0, 0)),               # W_out column
                pl.BlockSpec(memory_space=pltpu.MemorySpace.SMEM),            # b_out scalar
            ],
            out_specs=pl.BlockSpec((1, tile), lambda i: (0, i)),              # lane-dense out
        ),
        compiler_params=pltpu.CompilerParams(
            dimension_semantics=("parallel",)),
    )(xt, centers, w0, b0c, wh, bhc, woc, boc)
    return out.reshape(n, 1)


# ------------------------ pure-JAX reference (for check) ---------------------
def rbf_network_ref(x, centers, w0, b0, wh, bh, wo, bo):
    diff = x[:, None, :] - centers[None, :, :]             # (N, C, 2)
    d = jnp.sqrt(jnp.sum(diff * diff, axis=2))             # (N, C)
    h = ((1.0 - d) ** 6) * (35.0 * d * d + 18.0 * d + 3.0) / 3.0
    h = jnp.maximum(h @ w0.T + b0, 0.0)
    for l in range(N_LAYERS):
        h = jnp.maximum(h @ wh[l].T + bh[l], 0.0)
    return h @ wo.T + bo


# --------------------------------- main --------------------------------------
if __name__ == "__main__":
    key = jax.random.PRNGKey(0)
    ks = jax.random.split(key, 8)

    # Deterministic synthetic parameters (shapes from RBFNetwork.__init__,
    # PyTorch (out_features, in_features) weight layout).
    centers = jnp.asarray(build_centers(N_CENTERS))                             # (50, 2)
    w0 = jax.random.normal(ks[0], (N_NEURONS, OUT_DIM), jnp.float32) * 0.1
    b0 = jax.random.normal(ks[1], (N_NEURONS,), jnp.float32) * 0.1
    wh = jax.random.normal(ks[2], (N_LAYERS, N_NEURONS, N_NEURONS), jnp.float32) * 0.1
    bh = jax.random.normal(ks[3], (N_LAYERS, N_NEURONS), jnp.float32) * 0.1
    wo = jax.random.normal(ks[4], (1, N_NEURONS), jnp.float32) * 0.1
    bo = jax.random.normal(ks[5], (1,), jnp.float32) * 0.1

    # Input: batch of 2-D points in [0, 1]^2.
    x = jax.random.uniform(ks[6], (BATCH, 2), jnp.float32)

    out = jax.block_until_ready(rbf_network(x, centers, w0, b0, wh, bh, wo, bo))

    ref = rbf_network_ref(x, centers, w0, b0, wh, bh, wo, bo)
    np.testing.assert_allclose(np.asarray(out), np.asarray(ref),
                               rtol=1e-4, atol=1e-4)
    print("KERNEL_OK")
</pallas_src>

<mosaic_0001>
module attributes {stable_mosaic.version = 11 : i64} {
  func.func @rbf_network_kernel(%arg0: i32, %arg1: memref<2x128xf32, #tpu.memory_space<vmem>>, %arg2: memref<50x2xf32, #tpu.memory_space<vmem>>, %arg3: memref<32x50xf32, #tpu.memory_space<vmem>>, %arg4: memref<32x1xf32, #tpu.memory_space<vmem>>, %arg5: memref<3x32x32xf32, #tpu.memory_space<vmem>>, %arg6: memref<3x32x1xf32, #tpu.memory_space<vmem>>, %arg7: memref<32x1xf32, #tpu.memory_space<vmem>>, %arg8: memref<1x1xf32, #tpu.memory_space<smem>>, %arg9: memref<1x128xf32, #tpu.memory_space<vmem>>) attributes {dimension_semantics = [#tpu.dimension_semantics<parallel>], iteration_bounds = array<i64: 2>, scalar_prefetch = 0 : i64, scratch_operands = 0 : i64, tpu.core_type = #tpu.core_type<tc>, window_params = [{transform_indices = @transform_0, window_bounds = array<i64: 2, 128>}, {pipeline_mode = #tpu.pipeline_mode<synchronous>, transform_indices = @transform_1, window_bounds = array<i64: 50, 2>}, {pipeline_mode = #tpu.pipeline_mode<synchronous>, transform_indices = @transform_2, window_bounds = array<i64: 32, 50>}, {pipeline_mode = #tpu.pipeline_mode<synchronous>, transform_indices = @transform_3, window_bounds = array<i64: 32, 1>}, {pipeline_mode = #tpu.pipeline_mode<synchronous>, transform_indices = @transform_4, window_bounds = array<i64: 3, 32, 32>}, {pipeline_mode = #tpu.pipeline_mode<synchronous>, transform_indices = @transform_5, window_bounds = array<i64: 3, 32, 1>}, {pipeline_mode = #tpu.pipeline_mode<synchronous>, transform_indices = @transform_6, window_bounds = array<i64: 32, 1>}, {transform_indices = @transform_7, window_bounds = array<i64: 1, 1>}, {transform_indices = @transform_8, window_bounds = array<i64: 1, 128>}]} {
    %c0 = arith.constant 0 : index
    %c0_0 = arith.constant 0 : index
    %0 = vector.load %arg1[%c0, %c0_0] : memref<2x128xf32, #tpu.memory_space<vmem>>, vector<2x128xf32>
    %c0_1 = arith.constant 0 : index
    %c0_2 = arith.constant 0 : index
    %1 = vector.load %arg2[%c0_1, %c0_2] : memref<50x2xf32, #tpu.memory_space<vmem>>, vector<50x1xf32>
    %c0_3 = arith.constant 0 : index
    %c1 = arith.constant 1 : index
    %2 = vector.load %arg2[%c0_3, %c1] : memref<50x2xf32, #tpu.memory_space<vmem>>, vector<50x1xf32>
    %3 = vector.extract_strided_slice %0 {offsets = [0, 0], sizes = [1, 128], strides = [1, 1]} : vector<2x128xf32> to vector<1x128xf32>
    %4 = vector.broadcast %1 : vector<50x1xf32> to vector<50x128xf32>
    %5 = vector.broadcast %3 : vector<1x128xf32> to vector<50x128xf32>
    %6 = arith.subf %4, %5 : vector<50x128xf32>
    %7 = vector.extract_strided_slice %0 {offsets = [1, 0], sizes = [1, 128], strides = [1, 1]} : vector<2x128xf32> to vector<1x128xf32>
    %8 = vector.broadcast %2 : vector<50x1xf32> to vector<50x128xf32>
    %9 = vector.broadcast %7 : vector<1x128xf32> to vector<50x128xf32>
    %10 = arith.subf %8, %9 : vector<50x128xf32>
    %11 = arith.mulf %6, %6 : vector<50x128xf32>
    %12 = arith.mulf %10, %10 : vector<50x128xf32>
    %13 = arith.addf %11, %12 : vector<50x128xf32>
    %14 = math.sqrt %13 : vector<50x128xf32>
    %cst = arith.constant 1.000000e+00 : f32
    %15 = vector.broadcast %cst : f32 to vector<50x128xf32>
    %16 = arith.subf %15, %14 : vector<50x128xf32>
    %17 = arith.mulf %16, %16 : vector<50x128xf32>
    %18 = arith.mulf %17, %17 : vector<50x128xf32>
    %19 = arith.mulf %18, %17 : vector<50x128xf32>
    %cst_4 = arith.constant 11.666667 : f32
    %20 = vector.broadcast %cst_4 : f32 to vector<50x128xf32>
    %21 = arith.mulf %20, %14 : vector<50x128xf32>
    %cst_5 = arith.constant 6.000000e+00 : f32
    %22 = vector.broadcast %cst_5 : f32 to vector<50x128xf32>
    %23 = arith.addf %21, %22 : vector<50x128xf32>
    %24 = arith.mulf %14, %23 : vector<50x128xf32>
    %cst_6 = arith.constant 1.000000e+00 : f32
    %25 = vector.broadcast %cst_6 : f32 to vector<50x128xf32>
    %26 = arith.addf %24, %25 : vector<50x128xf32>
    %27 = arith.mulf %19, %26 : vector<50x128xf32>
    %c0_7 = arith.constant 0 : index
    %c0_8 = arith.constant 0 : index
    %28 = vector.load %arg3[%c0_7, %c0_8] : memref<32x50xf32, #tpu.memory_space<vmem>>, vector<32x50xf32>
    %cst_9 = arith.constant dense<0.000000e+00> : vector<32x128xf32>
    %29 = tpu.matmul %28, %27, %cst_9 {dimension_numbers = #tpu.dot_dimension_numbers<[1], [0], [0], [1], [0, 0, 1, 1], [], []>} : vector<32x50xf32>, vector<50x128xf32>, vector<32x128xf32> -> vector<32x128xf32>
    %c0_10 = arith.constant 0 : index
    %c0_11 = arith.constant 0 : index
    %30 = vector.load %arg4[%c0_10, %c0_11] : memref<32x1xf32, #tpu.memory_space<vmem>>, vector<32x1xf32>
    %31 = vector.broadcast %30 : vector<32x1xf32> to vector<32x128xf32>
    %32 = arith.addf %29, %31 : vector<32x128xf32>
    %cst_12 = arith.constant 0.000000e+00 : f32
    %33 = vector.broadcast %cst_12 : f32 to vector<32x128xf32>
    %34 = arith.maximumf %32, %33 : vector<32x128xf32>
    %c0_13 = arith.constant 0 : index
    %c0_14 = arith.constant 0 : index
    %c0_15 = arith.constant 0 : index
    %35 = vector.load %arg5[%c0_13, %c0_14, %c0_15] : memref<3x32x32xf32, #tpu.memory_space<vmem>>, vector<1x32x32xf32>
    %36 = vector.shape_cast %35 : vector<1x32x32xf32> to vector<32x32xf32>
    %cst_16 = arith.constant dense<0.000000e+00> : vector<32x128xf32>
    %37 = tpu.matmul %36, %34, %cst_16 {dimension_numbers = #tpu.dot_dimension_numbers<[1], [0], [0], [1], [0, 0, 1, 1], [], []>} : vector<32x32xf32>, vector<32x128xf32>, vector<32x128xf32> -> vector<32x128xf32>
    %c0_17 = arith.constant 0 : index
    %c0_18 = arith.constant 0 : index
    %c0_19 = arith.constant 0 : index
    %38 = vector.load %arg6[%c0_17, %c0_18, %c0_19] : memref<3x32x1xf32, #tpu.memory_space<vmem>>, vector<1x32x1xf32>
    %39 = vector.shape_cast %38 : vector<1x32x1xf32> to vector<32x1xf32>
    %40 = vector.broadcast %39 : vector<32x1xf32> to vector<32x128xf32>
    %41 = arith.addf %37, %40 : vector<32x128xf32>
    %cst_20 = arith.constant 0.000000e+00 : f32
    %42 = vector.broadcast %cst_20 : f32 to vector<32x128xf32>
    %43 = arith.maximumf %41, %42 : vector<32x128xf32>
    %c1_21 = arith.constant 1 : index
    %c0_22 = arith.constant 0 : index
    %c0_23 = arith.constant 0 : index
    %44 = vector.load %arg5[%c1_21, %c0_22, %c0_23] : memref<3x32x32xf32, #tpu.memory_space<vmem>>, vector<1x32x32xf32>
    %45 = vector.shape_cast %44 : vector<1x32x32xf32> to vector<32x32xf32>
    %cst_24 = arith.constant dense<0.000000e+00> : vector<32x128xf32>
    %46 = tpu.matmul %45, %43, %cst_24 {dimension_numbers = #tpu.dot_dimension_numbers<[1], [0], [0], [1], [0, 0, 1, 1], [], []>} : vector<32x32xf32>, vector<32x128xf32>, vector<32x128xf32> -> vector<32x128xf32>
    %c1_25 = arith.constant 1 : index
    %c0_26 = arith.constant 0 : index
    %c0_27 = arith.constant 0 : index
    %47 = vector.load %arg6[%c1_25, %c0_26, %c0_27] : memref<3x32x1xf32, #tpu.memory_space<vmem>>, vector<1x32x1xf32>
    %48 = vector.shape_cast %47 : vector<1x32x1xf32> to vector<32x1xf32>
    %49 = vector.broadcast %48 : vector<32x1xf32> to vector<32x128xf32>
    %50 = arith.addf %46, %49 : vector<32x128xf32>
    %cst_28 = arith.constant 0.000000e+00 : f32
    %51 = vector.broadcast %cst_28 : f32 to vector<32x128xf32>
    %52 = arith.maximumf %50, %51 : vector<32x128xf32>
    %c2 = arith.constant 2 : index
    %c0_29 = arith.constant 0 : index
    %c0_30 = arith.constant 0 : index
    %53 = vector.load %arg5[%c2, %c0_29, %c0_30] : memref<3x32x32xf32, #tpu.memory_space<vmem>>, vector<1x32x32xf32>
    %54 = vector.shape_cast %53 : vector<1x32x32xf32> to vector<32x32xf32>
    %cst_31 = arith.constant dense<0.000000e+00> : vector<32x128xf32>
    %55 = tpu.matmul %54, %52, %cst_31 {dimension_numbers = #tpu.dot_dimension_numbers<[1], [0], [0], [1], [0, 0, 1, 1], [], []>} : vector<32x32xf32>, vector<32x128xf32>, vector<32x128xf32> -> vector<32x128xf32>
    %c2_32 = arith.constant 2 : index
    %c0_33 = arith.constant 0 : index
    %c0_34 = arith.constant 0 : index
    %56 = vector.load %arg6[%c2_32, %c0_33, %c0_34] : memref<3x32x1xf32, #tpu.memory_space<vmem>>, vector<1x32x1xf32>
    %57 = vector.shape_cast %56 : vector<1x32x1xf32> to vector<32x1xf32>
    %58 = vector.broadcast %57 : vector<32x1xf32> to vector<32x128xf32>
    %59 = arith.addf %55, %58 : vector<32x128xf32>
    %cst_35 = arith.constant 0.000000e+00 : f32
    %60 = vector.broadcast %cst_35 : f32 to vector<32x128xf32>
    %61 = arith.maximumf %59, %60 : vector<32x128xf32>
    %c0_36 = arith.constant 0 : index
    %c0_37 = arith.constant 0 : index
    %62 = vector.load %arg7[%c0_36, %c0_37] : memref<32x1xf32, #tpu.memory_space<vmem>>, vector<32x1xf32>
    %63 = vector.broadcast %62 : vector<32x1xf32> to vector<32x128xf32>
    %64 = arith.mulf %61, %63 : vector<32x128xf32>
    %cst_38 = arith.constant dense<0.000000e+00> : vector<128xf32>
    %65 = vector.multi_reduction <add>, %64, %cst_38 [0] : vector<32x128xf32> to vector<128xf32>
    %66 = vector.shape_cast %65 : vector<128xf32> to vector<1x128xf32>
    %c0_39 = arith.constant 0 : index
    %c0_40 = arith.constant 0 : index
    %67 = memref.load %arg8[%c0_39, %c0_40] : memref<1x1xf32, #tpu.memory_space<smem>>
    %68 = vector.broadcast %67 : f32 to vector<1x128xf32>
    %69 = arith.addf %66, %68 : vector<1x128xf32>
    %c0_41 = arith.constant 0 : index
    %c0_42 = arith.constant 0 : index
    %70 = vector.load %arg9[%c0_41, %c0_42] : memref<1x128xf32, #tpu.memory_space<vmem>>, vector<1x128xf32>
    tpu.vector_store %arg9[%c0_41, %c0_42], %69 {strides = array<i32>} : memref<1x128xf32, #tpu.memory_space<vmem>>, vector<1x128xf32>,
    return
  }
  func.func @transform_0(%arg0: i32) -> (i32, i32) {
    %c0_i32 = arith.constant 0 : i32
    %c0_i32_0 = arith.constant 0 : i32
    return %c0_i32, %arg0 : i32, i32
  }
  func.func @transform_1(%arg0: i32) -> (i32, i32) {
    %c0_i32 = arith.constant 0 : i32
    %c0_i32_0 = arith.constant 0 : i32
    %c0_i32_1 = arith.constant 0 : i32
    return %c0_i32, %c0_i32_0 : i32, i32
  }
  func.func @transform_2(%arg0: i32) -> (i32, i32) {
    %c0_i32 = arith.constant 0 : i32
    %c0_i32_0 = arith.constant 0 : i32
    %c0_i32_1 = arith.constant 0 : i32
    return %c0_i32, %c0_i32_0 : i32, i32
  }
  func.func @transform_3(%arg0: i32) -> (i32, i32) {
    %c0_i32 = arith.constant 0 : i32
    %c0_i32_0 = arith.constant 0 : i32
    %c0_i32_1 = arith.constant 0 : i32
    return %c0_i32, %c0_i32_0 : i32, i32
  }
  func.func @transform_4(%arg0: i32) -> (i32, i32, i32) {
    %c0_i32 = arith.constant 0 : i32
    %c0_i32_0 = arith.constant 0 : i32
    %c0_i32_1 = arith.constant 0 : i32
    %c0_i32_2 = arith.constant 0 : i32
    return %c0_i32, %c0_i32_0, %c0_i32_1 : i32, i32, i32
  }
  func.func @transform_5(%arg0: i32) -> (i32, i32, i32) {
    %c0_i32 = arith.constant 0 : i32
    %c0_i32_0 = arith.constant 0 : i32
    %c0_i32_1 = arith.constant 0 : i32
    %c0_i32_2 = arith.constant 0 : i32
    return %c0_i32, %c0_i32_0, %c0_i32_1 : i32, i32, i32
  }
  func.func @transform_6(%arg0: i32) -> (i32, i32) {
    %c0_i32 = arith.constant 0 : i32
    %c0_i32_0 = arith.constant 0 : i32
    %c0_i32_1 = arith.constant 0 : i32
    return %c0_i32, %c0_i32_0 : i32, i32
  }
  func.func @transform_7(%arg0: i32) -> (i32, i32) {
    %c0_i32 = arith.constant 0 : i32
    %c0_i32_0 = arith.constant 0 : i32
    %c0_i32_1 = arith.constant 0 : i32
    return %c0_i32, %c0_i32_0 : i32, i32
  }
  func.func @transform_8(%arg0: i32) -> (i32, i32) {
    %c0_i32 = arith.constant 0 : i32
    %c0_i32_0 = arith.constant 0 : i32
    return %c0_i32, %arg0 : i32, i32
  }
}

</mosaic_0001>

<llo_original>
// kernel: tpu_custom_call.1
$region0: #{tpu_custom_call.1}
  #allocation0 [shape = 'u32[]', space=smem, size = 0x4, offset = 0x4, fixed_abs, tag = 'smem constant byte address 0x4 - core index']
  #allocation1 [shape = 'u32[144,128]{1,0:T(1,128)}', space=vmem, size = 0x12000, scoped, tag = 'internal scratch']
  #allocation2 [shape = 'f32[1,1]{1,0:T(1,128)S(6)}', space=smem, size = 0x200, scoped, tag = 'scoped memory for tpu_custom_call.1']
  %s0 = inlined_call_operand.vmem [shape: f32[2,256], index: 0, kind: input, shape index: {}]
  %s1 = inlined_call_operand.vmem [shape: f32[50,2], index: 1, kind: input, shape index: {}]
  %s2 = inlined_call_operand.vmem [shape: f32[32,50], index: 2, kind: input, shape index: {}]
  %s3 = inlined_call_operand.vmem [shape: f32[32,1], index: 3, kind: input, shape index: {}]
  %s4 = inlined_call_operand.vmem [shape: f32[3,32,32], index: 4, kind: input, shape index: {}]
  %s5 = inlined_call_operand.vmem [shape: f32[3,32,1], index: 5, kind: input, shape index: {}]
  %s6 = inlined_call_operand.vmem [shape: f32[32,1], index: 6, kind: input, shape index: {}]
  %s7 = inlined_call_operand.<no memory space> [shape: f32[1,1], index: 7, kind: input, shape index: {}]
  %s8 = inlined_call_operand.hbm [shape: f32[1,256], index: 8, kind: output, shape index: {}]
  %s9 = sld [smem:[#allocation0]]
  $region65: #{tpu_custom_call.1} parent=0
    _
  %s11 = ssub.s32 1, %s9
  %s12 = scalar_select 0, %s11, %s9
  %13 = sst [smem:[#allocation2]] %s7
  $region1: #{tpu_custom_call.1} parent=0
    #allocation3 [shape = 'u8[1024]{0}', space=vmem, size = 0x400, scoped, tag = 'output window, operand 0']
    #allocation4 [shape = 's32[2]{0}', space=sflag, size = 0x8, scoped, tag = 'scoped memory for tpu_custom_call.1']
    %14 = vsyncpa [#allocation4], 0
    %s15 = scalar_lea.sflag [#allocation4], 1
    %16 = vsyncpa %s15, 0
    loop: start=0, step=1, limit=4
    $region2: #{tpu_custom_call.1} parent=1 // loop_pre_header
      _
    $region3: #{tpu_custom_call.1} parent=1 // loop_header
      %s18 = sphi 0, %s22
      %p19 = scmp.ge.s32.totalorder %s18, 4
      %s28 = sphi 0, %s30
      %s31 = sphi 0, %s28
      %s32 = sphi 0, %s31
      %s48 = sphi 0, %s32
      %s52 = sphi 0, %s52
      %s54 = sphi 0, %s52
      %s55 = sphi 0, %s54
      %s69 = sphi 0, %s55
      %s73 = sphi 0, %s73
      %s75 = sphi 0, %s73
      %s76 = sphi 0, %s75
      %s90 = sphi 0, %s76
      %s94 = sphi 0, %s94
      %s96 = sphi 0, %s94
      %s97 = sphi 0, %s96
      %s111 = sphi 0, %s97
      %s115 = sphi 0, %s115
      %s117 = sphi 0, %s115
      %s118 = sphi 0, %s117
      %s132 = sphi 0, %s118
      %s136 = sphi 0, %s136
      %s138 = sphi 0, %s136
      %s139 = sphi 0, %s138
      %s153 = sphi 0, %s139
      %s157 = sphi 0, %s157
      %s159 = sphi 0, %s157
      %s160 = sphi 0, %s159
      %s174 = sphi 0, %s160
      %s178 = sphi 0, %s178
      %s180 = sphi 0, %s178
      %s181 = sphi 0, %s180
      %s195 = sphi 0, %s181
      %s201 = sphi 0, %s203
      %s204 = sphi 0, %s201
      %s205 = sphi 0, %s204
      %s221 = sphi 0, %s205
    $region4: #{tpu_custom_call.1} parent=1 // loop_header_branch
      %21 = sbr.rel (%p19) target = $region8
    $region5: #{tpu_custom_call.1} parent=1 // loop_body
      %s23 = ssub.s32 %s18, 1
      %s24 = ssub.s32 %s18, 2
      %s25 = sadd.s32 %s18, 1
      %s26 = ssub.s32 %s18, %s25
      %p27 = scmp.eq.s32.totalorder %s26, 0
      %s29 = sadd.s32 %s28, 1
      %s30 = scalar_select %p27, %s28, %s29
      %p33 = pneg %p27
      %p34 = scmp.eq.s32.totalorder %s18, 1
      %p35 = por %p33, %p34
      %p36 = scmp.ne.s32.totalorder %s28, %s31
      %p37 = scmp.eq.s32.totalorder %s18, 0
      %p38 = por %p36, %p37
      %p39 = scmp.ne.s32.totalorder %s28, %s31
      %p40 = scmp.eq.s32.totalorder %s23, 1
      %p41 = por %p39, %p40
      %p42 = scmp.ne.s32.totalorder %s31, %s32
      %p43 = scmp.eq.s32.totalorder %s23, 0
      %p44 = por %p42, %p43
      %p45 = scmp.ne.s32.totalorder %s31, %s32
      %p46 = scmp.eq.s32.totalorder %s24, 1
      %p47 = por %p45, %p46
      %p49 = scmp.ne.s32.totalorder %s32, %s48
      %p50 = scmp.eq.s32.totalorder %s24, 0
      %p51 = por %p49, %p50
      %s53 = sadd.s32 %s52, 1
      %p56 = scmp.eq.s32.totalorder %s18, 1
      %p57 = scmp.ne.s32.totalorder %s52, %s54
      %p58 = scmp.eq.s32.totalorder %s18, 0
      %p59 = por %p57, %p58
      %p60 = scmp.ne.s32.totalorder %s52, %s54
      %p61 = scmp.eq.s32.totalorder %s23, 1
      %p62 = por %p60, %p61
      %p63 = scmp.ne.s32.totalorder %s54, %s55
      %p64 = scmp.eq.s32.totalorder %s23, 0
      %p65 = por %p63, %p64
      %p66 = scmp.ne.s32.totalorder %s54, %s55
      %p67 = scmp.eq.s32.totalorder %s24, 1
      %p68 = por %p66, %p67
      %p70 = scmp.ne.s32.totalorder %s55, %s69
      %p71 = scmp.eq.s32.totalorder %s24, 0
      %p72 = por %p70, %p71
      %s74 = sadd.s32 %s73, 1
      %p77 = scmp.eq.s32.totalorder %s18, 1
      %p78 = scmp.ne.s32.totalorder %s73, %s75
      %p79 = scmp.eq.s32.totalorder %s18, 0
      %p80 = por %p78, %p79
      %p81 = scmp.ne.s32.totalorder %s73, %s75
      %p82 = scmp.eq.s32.totalorder %s23, 1
      %p83 = por %p81, %p82
      %p84 = scmp.ne.s32.totalorder %s75, %s76
      %p85 = scmp.eq.s32.totalorder %s23, 0
      %p86 = por %p84, %p85
      %p87 = scmp.ne.s32.totalorder %s75, %s76
      %p88 = scmp.eq.s32.totalorder %s24, 1
      %p89 = por %p87, %p88
      %p91 = scmp.ne.s32.totalorder %s76, %s90
      %p92 = scmp.eq.s32.totalorder %s24, 0
      %p93 = por %p91, %p92
      %s95 = sadd.s32 %s94, 1
      %p98 = scmp.eq.s32.totalorder %s18, 1
      %p99 = scmp.ne.s32.totalorder %s94, %s96
      %p100 = scmp.eq.s32.totalorder %s18, 0
      %p101 = por %p99, %p100
      %p102 = scmp.ne.s32.totalorder %s94, %s96
      %p103 = scmp.eq.s32.totalorder %s23, 1
      %p104 = por %p102, %p103
      %p105 = scmp.ne.s32.totalorder %s96, %s97
      %p106 = scmp.eq.s32.totalorder %s23, 0
      %p107 = por %p105, %p106
      %p108 = scmp.ne.s32.totalorder %s96, %s97
      %p109 = scmp.eq.s32.totalorder %s24, 1
      %p110 = por %p108, %p109
      %p112 = scmp.ne.s32.totalorder %s97, %s111
      %p113 = scmp.eq.s32.totalorder %s24, 0
      %p114 = por %p112, %p113
      %s116 = sadd.s32 %s115, 1
      %p119 = scmp.eq.s32.totalorder %s18, 1
      %p120 = scmp.ne.s32.totalorder %s115, %s117
      %p121 = scmp.eq.s32.totalorder %s18, 0
      %p122 = por %p120, %p121
      %p123 = scmp.ne.s32.totalorder %s115, %s117
      %p124 = scmp.eq.s32.totalorder %s23, 1
      %p125 = por %p123, %p124
      %p126 = scmp.ne.s32.totalorder %s117, %s118
      %p127 = scmp.eq.s32.totalorder %s23, 0
      %p128 = por %p126, %p127
      %p129 = scmp.ne.s32.totalorder %s117, %s118
      %p130 = scmp.eq.s32.totalorder %s24, 1
      %p131 = por %p129, %p130
      %p133 = scmp.ne.s32.totalorder %s118, %s132
      %p134 = scmp.eq.s32.totalorder %s24, 0
      %p135 = por %p133, %p134
      %s137 = sadd.s32 %s136, 1
      %p140 = scmp.eq.s32.totalorder %s18, 1
      %p141 = scmp.ne.s32.totalorder %s136, %s138
      %p142 = scmp.eq.s32.totalorder %s18, 0
      %p143 = por %p141, %p142
      %p144 = scmp.ne.s32.totalorder %s136, %s138
      %p145 = scmp.eq.s32.totalorder %s23, 1
      %p146 = por %p144, %p145
      %p147 = scmp.ne.s32.totalorder %s138, %s139
      %p148 = scmp.eq.s32.totalorder %s23, 0
      %p149 = por %p147, %p148
      %p150 = scmp.ne.s32.totalorder %s138, %s139
      %p151 = scmp.eq.s32.totalorder %s24, 1
      %p152 = por %p150, %p151
      %p154 = scmp.ne.s32.totalorder %s139, %s153
      %p155 = scmp.eq.s32.totalorder %s24, 0
      %p156 = por %p154, %p155
      %s158 = sadd.s32 %s157, 1
      %p161 = scmp.eq.s32.totalorder %s18, 1
      %p162 = scmp.ne.s32.totalorder %s157, %s159
      %p163 = scmp.eq.s32.totalorder %s18, 0
      %p164 = por %p162, %p163
      %p165 = scmp.ne.s32.totalorder %s157, %s159
      %p166 = scmp.eq.s32.totalorder %s23, 1
      %p167 = por %p165, %p166
      %p168 = scmp.ne.s32.totalorder %s159, %s160
      %p169 = scmp.eq.s32.totalorder %s23, 0
      %p170 = por %p168, %p169
      %p171 = scmp.ne.s32.totalorder %s159, %s160
      %p172 = scmp.eq.s32.totalorder %s24, 1
      %p173 = por %p171, %p172
      %p175 = scmp.ne.s32.totalorder %s160, %s174
      %p176 = scmp.eq.s32.totalorder %s24, 0
      %p177 = por %p175, %p176
      %s179 = sadd.s32 %s178, 1
      %p182 = scmp.eq.s32.totalorder %s18, 1
      %p183 = scmp.ne.s32.totalorder %s178, %s180
      %p184 = scmp.eq.s32.totalorder %s18, 0
      %p185 = por %p183, %p184
      %p186 = scmp.ne.s32.totalorder %s178, %s180
      %p187 = scmp.eq.s32.totalorder %s23, 1
      %p188 = por %p186, %p187
      %p189 = scmp.ne.s32.totalorder %s180, %s181
      %p190 = scmp.eq.s32.totalorder %s23, 0
      %p191 = por %p189, %p190
      %p192 = scmp.ne.s32.totalorder %s180, %s181
      %p193 = scmp.eq.s32.totalorder %s24, 1
      %p194 = por %p192, %p193
      %p196 = scmp.ne.s32.totalorder %s181, %s195
      %p197 = scmp.eq.s32.totalorder %s24, 0
      %p198 = por %p196, %p197
      %s199 = ssub.s32 %s18, %s25
      %p200 = scmp.eq.s32.totalorder %s199, 0
      %s202 = sadd.s32 %s201, 1
      %s203 = scalar_select %p200, %s201, %s202
      %p206 = pneg %p200
      %p207 = scmp.eq.s32.totalorder %s18, 1
      %p208 = por %p206, %p207
      %p209 = scmp.ne.s32.totalorder %s201, %s204
      %p210 = scmp.eq.s32.totalorder %s18, 0
      %p211 = por %p209, %p210
      %p212 = scmp.ne.s32.totalorder %s201, %s204
      %p213 = scmp.eq.s32.totalorder %s23, 1
      %p214 = por %p212, %p213
      %p215 = scmp.ne.s32.totalorder %s204, %s205
      %p216 = scmp.eq.s32.totalorder %s23, 0
      %p217 = por %p215, %p216
      %p218 = scmp.ne.s32.totalorder %s204, %s205
      %p219 = scmp.eq.s32.totalorder %s24, 1
      %p220 = por %p218, %p219
      %p222 = scmp.ne.s32.totalorder %s205, %s221
      %p223 = scmp.eq.s32.totalorder %s24, 0
      %p224 = por %p222, %p223
      %p225 = scmp.le.s32.totalorder 1, %s18
      %p226 = scmp.lt.s32.totalorder %s18, 3
      %p227 = pnand %p225, %p226
      %p228 = pneg %p227
      // Predicated region
      $region9: #{tpu_custom_call.1} parent=5 // pred_check
        _
      $region10: #{tpu_custom_call.1} parent=5 // pred_check_branch
        %230 = sbr.rel (%p227) target = $region12
      $region11: #{tpu_custom_call.1} parent=5 // pred_region
        %s231 = ssub.s32 %s18, 1
        // Predicated region
        $region13: #{tpu_custom_call.1} parent=11 // pred_check
          %p232 = pneg %p65
        $region14: #{tpu_custom_call.1} parent=11 // pred_check_branch
          %234 = sbr.rel (%p232) target = $region16
        $region15: #{tpu_custom_call.1} parent=11 // pred_region
          _
        $region16: #{tpu_custom_call.1} parent=11 // pred_fallthru
          _
        // Predicated region
        $region17: #{tpu_custom_call.1} parent=11 // pred_check
          %p235 = pneg %p86
        $region18: #{tpu_custom_call.1} parent=11 // pred_check_branch
          %237 = sbr.rel (%p235) target = $region20
        $region19: #{tpu_custom_call.1} parent=11 // pred_region
          _
        $region20: #{tpu_custom_call.1} parent=11 // pred_fallthru
          _
        // Predicated region
        $region21: #{tpu_custom_call.1} parent=11 // pred_check
          %p238 = pneg %p107
        $region22: #{tpu_custom_call.1} parent=11 // pred_check_branch
          %240 = sbr.rel (%p238) target = $region24
        $region23: #{tpu_custom_call.1} parent=11 // pred_region
          _
        $region24: #{tpu_custom_call.1} parent=11 // pred_fallthru
          _
        // Predicated region
        $region25: #{tpu_custom_call.1} parent=11 // pred_check
          %p241 = pneg %p128
        $region26: #{tpu_custom_call.1} parent=11 // pred_check_branch
          %243 = sbr.rel (%p241) target = $region28
        $region27: #{tpu_custom_call.1} parent=11 // pred_region
          _
        $region28: #{tpu_custom_call.1} parent=11 // pred_fallthru
          _
        // Predicated region
        $region29: #{tpu_custom_call.1} parent=11 // pred_check
          %p244 = pneg %p149
        $region30: #{tpu_custom_call.1} parent=11 // pred_check_branch
          %246 = sbr.rel (%p244) target = $region32
        $region31: #{tpu_custom_call.1} parent=11 // pred_region
          _
        $region32: #{tpu_custom_call.1} parent=11 // pred_fallthru
          _
        // Predicated region
        $region33: #{tpu_custom_call.1} parent=11 // pred_check
          %p247 = pneg %p170
        $region34: #{tpu_custom_call.1} parent=11 // pred_check_branch
          %249 = sbr.rel (%p247) target = $region36
        $region35: #{tpu_custom_call.1} parent=11 // pred_region
          _
        $region36: #{tpu_custom_call.1} parent=11 // pred_fallthru
          _
        // Predicated region
        $region37: #{tpu_custom_call.1} parent=11 // pred_check
          %p250 = pneg %p191
        $region38: #{tpu_custom_call.1} parent=11 // pred_check_branch
          %252 = sbr.rel (%p250) target = $region40
        $region39: #{tpu_custom_call.1} parent=11 // pred_region
          _
        $region40: #{tpu_custom_call.1} parent=11 // pred_fallthru
          _
      $region12: #{tpu_custom_call.1} parent=5 // pred_fallthru
        _
      %p253 = scmp.lt.s32.totalorder %s18, 2
      // Predicated region
      $region41: #{tpu_custom_call.1} parent=5 // pred_check
        %p254 = pneg %p253
      $region42: #{tpu_custom_call.1} parent=5 // pred_check_branch
        %256 = sbr.rel (%p254) target = $region44
      $region43: #{tpu_custom_call.1} parent=5 // pred_region
        // Predicated region
        $region45: #{tpu_custom_call.1} parent=43 // pred_check
          %p257 = pneg %p38
        $region46: #{tpu_custom_call.1} parent=43 // pred_check_branch
          %259 = sbr.rel (%p257) target = $region48
        $region47: #{tpu_custom_call.1} parent=43 // pred_region
          %p260 = scmp.lt.s32.totalorder %s18, 1
          %s261 = scalar_select %p260, %s18, 1
          %s262 = smul.addr %s261, 2
          %s263 = scalar_lea.vmem %s0, %s262
        $region48: #{tpu_custom_call.1} parent=43 // pred_fallthru
          _
      $region44: #{tpu_custom_call.1} parent=5 // pred_fallthru
        _
      %p264 = scmp.le.s32.totalorder 1, %s18
      %p265 = scmp.lt.s32.totalorder %s18, 3
      %p266 = pnand %p264, %p265
      %p267 = pneg %p266
      // Predicated region
      $region49: #{tpu_custom_call.1} parent=5 // pred_check
        _
      $region50: #{tpu_custom_call.1} parent=5 // pred_check_branch
        %269 = sbr.rel (%p266) target = $region52
      $region51: #{tpu_custom_call.1} parent=5 // pred_region
        %s270 = ssub.s32 %s18, 1
        %p271 = scmp.lt.s32.totalorder %s23, 1
        %s272 = scalar_select %p271, %s23, 1
        %s273 = smul.addr %s272, 2
        %s274 = scalar_lea.vmem %s0, %s273
        %p275 = pneg %p44
        %p276 = pneg %p41
        %p277 = pneg %p65
        %p278 = pneg %p62
        %p279 = pneg %p86
        %p280 = pneg %p83
        %p281 = pneg %p107
        %p282 = pneg %p104
        %p283 = pneg %p128
        %p284 = pneg %p125
        %p285 = pneg %p149
        %p286 = pneg %p146
        %p287 = pneg %p170
        %p288 = pneg %p167
        %p289 = pneg %p191
        %p290 = pneg %p188
        %p291 = pneg %p217
        %p292 = pneg %p214
        %s293 = sand.u32 %s204, 1
        %s294 = scalar_lea.sflag [#allocation4], %s293
        %s295 = sand.u32 %s204, 1
        %s296 = scalar_lea.vmem [#allocation3], %s295
        %p297 = scmp.lt.s32.totalorder %s23, 1
        %s298 = scalar_select %p297, %s23, 1
        %s299 = smul.addr %s298, 2
        %s300 = scalar_lea.vmem %s0, %s299
        %v301 = vld [vmem:[%s300] sm:$0x3]
        %v302 = vld [vmem:[%s1] sm:$0xff]
        %v303 = vld [vmem:[%s1 + $0x8] sm:$0xff]
        %v304 = vld [vmem:[%s1 + $0x10] sm:$0xff]
        %v305 = vld [vmem:[%s1 + $0x18] sm:$0xff]
        %v306 = vld [vmem:[%s1 + $0x20] sm:$0xff]
        %v307 = vld [vmem:[%s1 + $0x28] sm:$0xff]
        %v308 = vld [vmem:[%s1 + $0x30] sm:$0x3]
        %310 = vset.pattern.permute.xlu0 0
        %311 = vperm.xlu0 %310, %v302
        %v312 = vpop.permute.xlu0 %311
        %315 = vset.pattern.permute.xlu0 0
        %316 = vperm.xlu0 %315, %v303
        %v317 = vpop.permute.xlu0 %316
        %320 = vset.pattern.permute.xlu0 0
        %321 = vperm.xlu0 %320, %v304
        %v322 = vpop.permute.xlu0 %321
        %325 = vset.pattern.permute.xlu0 0
        %326 = vperm.xlu0 %325, %v305
        %v327 = vpop.permute.xlu0 %326
        %330 = vset.pattern.permute.xlu0 0
        %331 = vperm.xlu0 %330, %v306
        %v332 = vpop.permute.xlu0 %331
        %335 = vset.pattern.permute.xlu0 0
        %336 = vperm.xlu0 %335, %v307
        %v337 = vpop.permute.xlu0 %336
        %340 = vset.pattern.permute.xlu0 0
        %341 = vperm.xlu0 %340, %v308
        %v342 = vpop.permute.xlu0 %341
        %v344 = vlaneseq
        %v345 = vshrl.u32 %v344, 7
        %v346 = vsub.s32 0, %v345
        %v347 = vrot.slane %v301, %v346
        %v348 = vsub.f32 %v312, %v347
        %v349 = vsub.f32 %v317, %v347
        %v350 = vsub.f32 %v322, %v347
        %v351 = vsub.f32 %v327, %v347
        %v352 = vsub.f32 %v332, %v347
        %v353 = vsub.f32 %v337, %v347
        %v354 = vsub.f32 %v342, %v347
        %355 = vset.pattern.permute.xlu0 1
        %356 = vperm.xlu0 %355, %v302
        %v357 = vpop.permute.xlu0 %356
        %359 = vset.pattern.permute.xlu0 1
        %360 = vperm.xlu0 %359, %v303
        %v361 = vpop.permute.xlu0 %360
        %363 = vset.pattern.permute.xlu0 1
        %364 = vperm.xlu0 %363, %v304
        %v365 = vpop.permute.xlu0 %364
        %367 = vset.pattern.permute.xlu0 1
        %368 = vperm.xlu0 %367, %v305
        %v369 = vpop.permute.xlu0 %368
        %371 = vset.pattern.permute.xlu0 1
        %372 = vperm.xlu0 %371, %v306
        %v373 = vpop.permute.xlu0 %372
        %375 = vset.pattern.permute.xlu0 1
        %376 = vperm.xlu0 %375, %v307
        %v377 = vpop.permute.xlu0 %376
        %379 = vset.pattern.permute.xlu0 1
        %380 = vperm.xlu0 %379, %v308
        %v381 = vpop.permute.xlu0 %380
        %v383 = vlaneseq
        %v384 = vshrl.u32 %v383, 7
        %v385 = vsub.s32 1, %v384
        %v386 = vrot.slane %v301, %v385
        %v387 = vsub.f32 %v357, %v386
        %v388 = vsub.f32 %v361, %v386
        %v389 = vsub.f32 %v365, %v386
        %v390 = vsub.f32 %v369, %v386
        %v391 = vsub.f32 %v373, %v386
        %v392 = vsub.f32 %v377, %v386
        %v393 = vsub.f32 %v381, %v386
        %v394 = vmul.f32 %v348, %v348
        %v395 = vmul.f32 %v349, %v349
        %v396 = vmul.f32 %v350, %v350
        %v397 = vmul.f32 %v351, %v351
        %v398 = vmul.f32 %v352, %v352
        %v399 = vmul.f32 %v353, %v353
        %v400 = vmul.f32 %v354, %v354
        %v401 = vmul.f32 %v387, %v387
        %v402 = vmul.f32 %v388, %v388
        %v403 = vmul.f32 %v389, %v389
        %v404 = vmul.f32 %v390, %v390
        %v405 = vmul.f32 %v391, %v391
        %v406 = vmul.f32 %v392, %v392
        %v407 = vmul.f32 %v393, %v393
        %v408 = vadd.f32 %v394, %v401
        %v409 = vadd.f32 %v395, %v402
        %v410 = vadd.f32 %v396, %v403
        %v411 = vadd.f32 %v397, %v404
        %v412 = vadd.f32 %v398, %v405
        %v413 = vadd.f32 %v399, %v406
        %v414 = vadd.f32 %v400, %v407
        %v415 = vrsqrt.pop %v408
        %v416 = vmul.f32 %v408, %v415
        %vm417 = vcmp.eq.f32.partialorder %v408, inf
        %v418 = vsel %vm417, %v408, %v416
        %vm419 = vcmp.eq.f32.partialorder %v408, 0.0
        %v420 = vand.u32 %v408, 2147483648
        %v421 = vsel %vm419, %v420, %v418
        %v422 = vrsqrt.pop %v409
        %v423 = vmul.f32 %v409, %v422
        %vm424 = vcmp.eq.f32.partialorder %v409, inf
        %v425 = vsel %vm424, %v409, %v423
        %vm426 = vcmp.eq.f32.partialorder %v409, 0.0
        %v427 = vand.u32 %v409, 2147483648
        %v428 = vsel %vm426, %v427, %v425
        %v429 = vrsqrt.pop %v410
        %v430 = vmul.f32 %v410, %v429
        %vm431 = vcmp.eq.f32.partialorder %v410, inf
        %v432 = vsel %vm431, %v410, %v430
        %vm433 = vcmp.eq.f32.partialorder %v410, 0.0
        %v434 = vand.u32 %v410, 2147483648
        %v435 = vsel %vm433, %v434, %v432
        %v436 = vrsqrt.pop %v411
        %v437 = vmul.f32 %v411, %v436
        %vm438 = vcmp.eq.f32.partialorder %v411, inf
        %v439 = vsel %vm438, %v411, %v437
        %vm440 = vcmp.eq.f32.partialorder %v411, 0.0
        %v441 = vand.u32 %v411, 2147483648
        %v442 = vsel %vm440, %v441, %v439
        %v443 = vrsqrt.pop %v412
        %v444 = vmul.f32 %v412, %v443
        %vm445 = vcmp.eq.f32.partialorder %v412, inf
        %v446 = vsel %vm445, %v412, %v444
        %vm447 = vcmp.eq.f32.partialorder %v412, 0.0
        %v448 = vand.u32 %v412, 2147483648
        %v449 = vsel %vm447, %v448, %v446
        %v450 = vrsqrt.pop %v413
        %v451 = vmul.f32 %v413, %v450
        %vm452 = vcmp.eq.f32.partialorder %v413, inf
        %v453 = vsel %vm452, %v413, %v451
        %vm454 = vcmp.eq.f32.partialorder %v413, 0.0
        %v455 = vand.u32 %v413, 2147483648
        %v456 = vsel %vm454, %v455, %v453
        %v457 = vrsqrt.pop %v414
        %v458 = vmul.f32 %v414, %v457
        %vm459 = vcmp.eq.f32.partialorder %v414, inf
        %v460 = vsel %vm459, %v414, %v458
        %vm461 = vcmp.eq.f32.partialorder %v414, 0.0
        %v462 = vand.u32 %v414, 2147483648
        %v463 = vsel %vm461, %v462, %v460
        %v464 = vsub.f32 1.0, %v421
        %v465 = vsub.f32 1.0, %v428
        %v466 = vsub.f32 1.0, %v435
        %v467 = vsub.f32 1.0, %v442
        %v468 = vsub.f32 1.0, %v449
        %v469 = vsub.f32 1.0, %v456
        %v470 = vsub.f32 1.0, %v463
        %v471 = vmul.f32 %v464, %v464
        %v472 = vmul.f32 %v465, %v465
        %v473 = vmul.f32 %v466, %v466
        %v474 = vmul.f32 %v467, %v467
        %v475 = vmul.f32 %v468, %v468
        %v476 = vmul.f32 %v469, %v469
        %v477 = vmul.f32 %v470, %v470
        %v478 = vmul.f32 %v471, %v471
        %v479 = vmul.f32 %v472, %v472
        %v480 = vmul.f32 %v473, %v473
        %v481 = vmul.f32 %v474, %v474
        %v482 = vmul.f32 %v475, %v475
        %v483 = vmul.f32 %v476, %v476
        %v484 = vmul.f32 %v477, %v477
        %v485 = vmul.f32 %v478, %v471
        %v486 = vmul.f32 %v479, %v472
        %v487 = vmul.f32 %v480, %v473
        %v488 = vmul.f32 %v481, %v474
        %v489 = vmul.f32 %v482, %v475
        %v490 = vmul.f32 %v483, %v476
        %v491 = vmul.f32 %v484, %v477
        %v492 = vmul.f32 %v421, 11.666667
        %v493 = vmul.f32 %v428, 11.666667
        %v494 = vmul.f32 %v435, 11.666667
        %v495 = vmul.f32 %v442, 11.666667
        %v496 = vmul.f32 %v449, 11.666667
        %v497 = vmul.f32 %v456, 11.666667
        %v498 = vmul.f32 %v463, 11.666667
        %v499 = vadd.f32 %v492, 6.0
        %v500 = vadd.f32 %v493, 6.0
        %v501 = vadd.f32 %v494, 6.0
        %v502 = vadd.f32 %v495, 6.0
        %v503 = vadd.f32 %v496, 6.0
        %v504 = vadd.f32 %v497, 6.0
        %v505 = vadd.f32 %v498, 6.0
        %v506 = vmul.f32 %v421, %v499
        %v507 = vmul.f32 %v428, %v500
        %v508 = vmul.f32 %v435, %v501
        %v509 = vmul.f32 %v442, %v502
        %v510 = vmul.f32 %v449, %v503
        %v511 = vmul.f32 %v456, %v504
        %v512 = vmul.f32 %v463, %v505
        %v513 = vadd.f32 %v506, 1.0
        %v514 = vadd.f32 %v507, 1.0
        %v515 = vadd.f32 %v508, 1.0
        %v516 = vadd.f32 %v509, 1.0
        %v517 = vadd.f32 %v510, 1.0
        %v518 = vadd.f32 %v511, 1.0
        %v519 = vadd.f32 %v512, 1.0
        %v520 = vmul.f32 %v485, %v513
        %v521 = vmul.f32 %v486, %v514
        %v522 = vmul.f32 %v487, %v515
        %v523 = vmul.f32 %v488, %v516
        %v524 = vmul.f32 %v489, %v517
        %v525 = vmul.f32 %v490, %v518
        %v526 = vmul.f32 %v491, %v519
        %v527 = vld [vmem:[%s2] sm:$0xff]
        %v528 = vld [vmem:[%s2 + $0x8] sm:$0xff]
        %v529 = vld [vmem:[%s2 + $0x10] sm:$0xff]
        %v530 = vld [vmem:[%s2 + $0x18] sm:$0xff]
        %v531 = vld [vmem:[%s3] sm:$0xff]
        %v532 = vld [vmem:[%s3 + $0x8] sm:$0xff]
        %v533 = vld [vmem:[%s3 + $0x10] sm:$0xff]
        %v534 = vld [vmem:[%s3 + $0x18] sm:$0xff]
        %536 = vset.pattern.permute.xlu0 0
        %537 = vperm.xlu0 %536, %v531
        %v538 = vpop.permute.xlu0 %537
        %541 = vset.pattern.permute.xlu0 0
        %542 = vperm.xlu0 %541, %v532
        %v543 = vpop.permute.xlu0 %542
        %546 = vset.pattern.permute.xlu0 0
        %547 = vperm.xlu0 %546, %v533
        %v548 = vpop.permute.xlu0 %547
        %551 = vset.pattern.permute.xlu0 0
        %552 = vperm.xlu0 %551, %v534
        %v553 = vpop.permute.xlu0 %552
        %vm555 = vcmask 408576
        %v557 = vsel %vm555, %v527, 0
        %v560 = vsel %vm555, %v528, 0
        %v563 = vsel %vm555, %v529, 0
        %v566 = vsel %vm555, %v530, 0
        %vm568 = vcmask 1041408
        %v570 = vsel %vm568, %v526, 0
        %572 = vmatprep.subr.mxu0 0.0
        %573 = vmatpush1.msra.mxu0 0.0
        %574 = vmatprep.subr.mxu0 0.0
        %575 = vmatpush1.msra.mxu0 0.0
        %576 = vmatprep.subr.mxu0 0.0
        %577 = vmatpush1.msra.mxu0 0.0
        %578 = vmatprep.subr.mxu0 0.0
        %579 = vmatpush1.msra.mxu0 0.0
        %580 = vmatprep.subr.mxu0 0.0
        %581 = vmatpush1.msra.mxu0 0.0
        %582 = vmatprep.subr.mxu0 0.0
        %583 = vmatpush1.msra.mxu0 0.0
        %584 = vmatprep.subr.mxu0 0.0
        %585 = vmatpush1.msra.mxu0 0.0
        %586 = vmatprep.subr.mxu0 0.0
        %587 = vmatpush1.msra.mxu0 0.0
        %588 = vmatprep.subr.mxu0 0.0
        %589 = vmatpush1.msra.mxu0 0.0
        %590 = vmatprep.subr.mxu0 0.0
        %591 = vmatpush1.msra.mxu0 %v570
        %592 = vmatprep.subr.mxu0 0.0
        %593 = vmatpush1.msra.mxu0 %v525
        %594 = vmatprep.subr.mxu0 0.0
        %595 = vmatpush1.msra.mxu0 %v524
        %596 = vmatprep.subr.mxu0 0.0
        %597 = vmatpush1.msra.mxu0 %v523
        %598 = vmatprep.subr.mxu0 0.0
        %599 = vmatpush1.msra.mxu0 %v522
        %600 = vmatprep.subr.mxu0 0.0
        %601 = vmatpush1.msra.mxu0 %v521
        %602 = vmatprep.subr.mxu0 0.0
        %603 = vmatpush1.msra.mxu0 %v520
        %604 = vmatprep.subr.mxu0 0.0
        %605 = vmatpush2.msra.mxu0 0.0
        %606 = vmatprep.subr.mxu0 0.0
        %607 = vmatpush2.msra.mxu0 0.0
        %608 = vmatprep.subr.mxu0 0.0
        %609 = vmatpush2.msra.mxu0 0.0
        %610 = vmatprep.subr.mxu0 0.0
        %611 = vmatpush2.msra.mxu0 0.0
        %612 = vmatprep.subr.mxu0 0.0
        %613 = vmatpush2.msra.mxu0 0.0
        %614 = vmatprep.subr.mxu0 0.0
        %615 = vmatpush2.msra.mxu0 0.0
        %616 = vmatprep.subr.mxu0 0.0
        %617 = vmatpush2.msra.mxu0 0.0
        %618 = vmatprep.subr.mxu0 0.0
        %619 = vmatpush2.msra.mxu0 0.0
        %620 = vmatprep.subr.mxu0 0.0
        %621 = vmatpush2.msra.mxu0 0.0
        %622 = vmatprep.subr.mxu0 0.0
        %623 = vmatpush2.msra.mxu0 0.0
        %624 = vmatprep.subr.mxu0 0.0
        %625 = vmatpush2.msra.mxu0 0.0
        %626 = vmatprep.subr.mxu0 0.0
        %627 = vmatpush2.msra.mxu0 0.0
        %628 = vmatprep.subr.mxu0 0.0
        %629 = vmatpush2.msra.mxu0 0.0
        %630 = vmatprep.subr.mxu0 0.0
        %631 = vmatpush2.msra.mxu0 0.0
        %632 = vmatprep.subr.mxu0 0.0
        %633 = vmatpush2.msra.mxu0 0.0
        %634 = vmatprep.subr.mxu0 0.0
        %635 = vmatpush2.msra.mxu0 0.0
        %636 = vmatprep.mubr.f32.mxu0 0.0
        %637 = vmatmul.mubr.f32.gmra.mxu0 %v557
        %v638 = vpop.f32.mrf.mxu0
        %v639 = vadd.f32 %v538, %v638
        %v640 = vpop.f32.mrf.mxu0
        %641 = vmatprep.mubr.f32.mxu0 0.0
        %642 = vmatmul.mubr.f32.gmra.mxu0 %v560
        %v643 = vpop.f32.mrf.mxu0
        %v644 = vadd.f32 %v543, %v643
        %v645 = vpop.f32.mrf.mxu0
        %646 = vmatprep.mubr.f32.mxu0 0.0
        %647 = vmatmul.mubr.f32.gmra.mxu0 %v563
        %v648 = vpop.f32.mrf.mxu0
        %v649 = vadd.f32 %v548, %v648
        %v650 = vpop.f32.mrf.mxu0
        %651 = vmatprep.mubr.f32.mxu0 0.0
        %652 = vmatmul.mubr.f32.gmra.mxu0 %v566
        %v653 = vpop.f32.mrf.mxu0
        %v654 = vadd.f32 %v553, %v653
        %v655 = vpop.f32.mrf.mxu0
        %656 = vdwg.mxu0
        %v657 = vmax.f32 %v639, 0.0
        %v658 = vmax.f32 %v644, 0.0
        %v659 = vmax.f32 %v649, 0.0
        %v660 = vmax.f32 %v654, 0.0
        %v661 = vld [vmem:[%s4] sm:$0xff]
        %v662 = vld [vmem:[%s4 + $0x8] sm:$0xff]
        %v663 = vld [vmem:[%s4 + $0x10] sm:$0xff]
        %v664 = vld [vmem:[%s4 + $0x18] sm:$0xff]
        %v665 = vld [vmem:[%s5] sm:$0xff]
        %v666 = vld [vmem:[%s5 + $0x8] sm:$0xff]
        %v667 = vld [vmem:[%s5 + $0x10] sm:$0xff]
        %v668 = vld [vmem:[%s5 + $0x18] sm:$0xff]
        %670 = vset.pattern.permute.xlu0 0
        %671 = vperm.xlu0 %670, %v665
        %v672 = vpop.permute.xlu0 %671
        %675 = vset.pattern.permute.xlu0 0
        %676 = vperm.xlu0 %675, %v666
        %v677 = vpop.permute.xlu0 %676
        %680 = vset.pattern.permute.xlu0 0
        %681 = vperm.xlu0 %680, %v667
        %v682 = vpop.permute.xlu0 %681
        %685 = vset.pattern.permute.xlu0 0
        %686 = vperm.xlu0 %685, %v668
        %v687 = vpop.permute.xlu0 %686
        %vm689 = vcmask 261120
        %v691 = vsel %vm689, %v661, 0
        %v694 = vsel %vm689, %v662, 0
        %v697 = vsel %vm689, %v663, 0
        %v700 = vsel %vm689, %v664, 0
        %702 = vmatprep.subr.mxu0 0.0
        %703 = vmatpush1.msra.mxu0 0.0
        %704 = vmatprep.subr.mxu0 0.0
        %705 = vmatpush1.msra.mxu0 0.0
        %706 = vmatprep.subr.mxu0 0.0
        %707 = vmatpush1.msra.mxu0 0.0
        %708 = vmatprep.subr.mxu0 0.0
        %709 = vmatpush1.msra.mxu0 0.0
        %710 = vmatprep.subr.mxu0 0.0
        %711 = vmatpush1.msra.mxu0 0.0
        %712 = vmatprep.subr.mxu0 0.0
        %713 = vmatpush1.msra.mxu0 0.0
        %714 = vmatprep.subr.mxu0 0.0
        %715 = vmatpush1.msra.mxu0 0.0
        %716 = vmatprep.subr.mxu0 0.0
        %717 = vmatpush1.msra.mxu0 0.0
        %718 = vmatprep.subr.mxu0 0.0
        %719 = vmatpush1.msra.mxu0 0.0
        %720 = vmatprep.subr.mxu0 0.0
        %721 = vmatpush1.msra.mxu0 0.0
        %722 = vmatprep.subr.mxu0 0.0
        %723 = vmatpush1.msra.mxu0 0.0
        %724 = vmatprep.subr.mxu0 0.0
        %725 = vmatpush1.msra.mxu0 0.0
        %726 = vmatprep.subr.mxu0 0.0
        %727 = vmatpush1.msra.mxu0 %v660
        %728 = vmatprep.subr.mxu0 0.0
        %729 = vmatpush1.msra.mxu0 %v659
        %730 = vmatprep.subr.mxu0 0.0
        %731 = vmatpush1.msra.mxu0 %v658
        %732 = vmatprep.subr.mxu0 0.0
        %733 = vmatpush1.msra.mxu0 %v657
        %734 = vmatprep.subr.mxu0 0.0
        %735 = vmatpush2.msra.mxu0 0.0
        %736 = vmatprep.subr.mxu0 0.0
        %737 = vmatpush2.msra.mxu0 0.0
        %738 = vmatprep.subr.mxu0 0.0
        %739 = vmatpush2.msra.mxu0 0.0
        %740 = vmatprep.subr.mxu0 0.0
        %741 = vmatpush2.msra.mxu0 0.0
        %742 = vmatprep.subr.mxu0 0.0
        %743 = vmatpush2.msra.mxu0 0.0
        %744 = vmatprep.subr.mxu0 0.0
        %745 = vmatpush2.msra.mxu0 0.0
        %746 = vmatprep.subr.mxu0 0.0
        %747 = vmatpush2.msra.mxu0 0.0
        %748 = vmatprep.subr.mxu0 0.0
        %749 = vmatpush2.msra.mxu0 0.0
        %750 = vmatprep.subr.mxu0 0.0
        %751 = vmatpush2.msra.mxu0 0.0
        %752 = vmatprep.subr.mxu0 0.0
        %753 = vmatpush2.msra.mxu0 0.0
        %754 = vmatprep.subr.mxu0 0.0
        %755 = vmatpush2.msra.mxu0 0.0
        %756 = vmatprep.subr.mxu0 0.0
        %757 = vmatpush2.msra.mxu0 0.0
        %758 = vmatprep.subr.mxu0 0.0
        %759 = vmatpush2.msra.mxu0 0.0
        %760 = vmatprep.subr.mxu0 0.0
        %761 = vmatpush2.msra.mxu0 0.0
        %762 = vmatprep.subr.mxu0 0.0
        %763 = vmatpush2.msra.mxu0 0.0
        %764 = vmatprep.subr.mxu0 0.0
        %765 = vmatpush2.msra.mxu0 0.0
        %766 = vmatprep.mubr.f32.mxu0 0.0
        %767 = vmatmul.mubr.f32.gmra.mxu0 %v691
        %v768 = vpop.f32.mrf.mxu0
        %v769 = vadd.f32 %v672, %v768
        %v770 = vpop.f32.mrf.mxu0
        %771 = vmatprep.mubr.f32.mxu0 0.0
        %772 = vmatmul.mubr.f32.gmra.mxu0 %v694
        %v773 = vpop.f32.mrf.mxu0
        %v774 = vadd.f32 %v677, %v773
        %v775 = vpop.f32.mrf.mxu0
        %776 = vmatprep.mubr.f32.mxu0 0.0
        %777 = vmatmul.mubr.f32.gmra.mxu0 %v697
        %v778 = vpop.f32.mrf.mxu0
        %v779 = vadd.f32 %v682, %v778
        %v780 = vpop.f32.mrf.mxu0
        %781 = vmatprep.mubr.f32.mxu0 0.0
        %782 = vmatmul.mubr.f32.gmra.mxu0 %v700
        %v783 = vpop.f32.mrf.mxu0
        %v784 = vadd.f32 %v687, %v783
        %v785 = vpop.f32.mrf.mxu0
        %786 = vdwg.mxu0
        %v787 = vmax.f32 %v769, 0.0
        %v788 = vmax.f32 %v774, 0.0
        %v789 = vmax.f32 %v779, 0.0
        %v790 = vmax.f32 %v784, 0.0
        %s791 = scalar_lea.vmem %s4, 32
        %v792 = vld [vmem:[%s791] sm:$0xff]
        %v793 = vld [vmem:[%s791 + $0x8] sm:$0xff]
        %v794 = vld [vmem:[%s791 + $0x10] sm:$0xff]
        %v795 = vld [vmem:[%s791 + $0x18] sm:$0xff]
        %s796 = scalar_lea.vmem %s5, 32
        %v797 = vld [vmem:[%s796] sm:$0xff]
        %v798 = vld [vmem:[%s796 + $0x8] sm:$0xff]
        %v799 = vld [vmem:[%s796 + $0x10] sm:$0xff]
        %v800 = vld [vmem:[%s796 + $0x18] sm:$0xff]
        %802 = vset.pattern.permute.xlu0 0
        %803 = vperm.xlu0 %802, %v797
        %v804 = vpop.permute.xlu0 %803
        %807 = vset.pattern.permute.xlu0 0
        %808 = vperm.xlu0 %807, %v798
        %v809 = vpop.permute.xlu0 %808
        %812 = vset.pattern.permute.xlu0 0
        %813 = vperm.xlu0 %812, %v799
        %v814 = vpop.permute.xlu0 %813
        %817 = vset.pattern.permute.xlu0 0
        %818 = vperm.xlu0 %817, %v800
        %v819 = vpop.permute.xlu0 %818
        %v822 = vsel %vm689, %v792, 0
        %v825 = vsel %vm689, %v793, 0
        %v828 = vsel %vm689, %v794, 0
        %v831 = vsel %vm689, %v795, 0
        %833 = vmatprep.subr.mxu0 0.0
        %834 = vmatpush1.msra.mxu0 0.0
        %835 = vmatprep.subr.mxu0 0.0
        %836 = vmatpush1.msra.mxu0 0.0
        %837 = vmatprep.subr.mxu0 0.0
        %838 = vmatpush1.msra.mxu0 0.0
        %839 = vmatprep.subr.mxu0 0.0
        %840 = vmatpush1.msra.mxu0 0.0
        %841 = vmatprep.subr.mxu0 0.0
        %842 = vmatpush1.msra.mxu0 0.0
        %843 = vmatprep.subr.mxu0 0.0
        %844 = vmatpush1.msra.mxu0 0.0
        %845 = vmatprep.subr.mxu0 0.0
        %846 = vmatpush1.msra.mxu0 0.0
        %847 = vmatprep.subr.mxu0 0.0
        %848 = vmatpush1.msra.mxu0 0.0
        %849 = vmatprep.subr.mxu0 0.0
        %850 = vmatpush1.msra.mxu0 0.0
        %851 = vmatprep.subr.mxu0 0.0
        %852 = vmatpush1.msra.mxu0 0.0
        %853 = vmatprep.subr.mxu0 0.0
        %854 = vmatpush1.msra.mxu0 0.0
        %855 = vmatprep.subr.mxu0 0.0
        %856 = vmatpush1.msra.mxu0 0.0
        %857 = vmatprep.subr.mxu0 0.0
        %858 = vmatpush1.msra.mxu0 %v790
        %859 = vmatprep.subr.mxu0 0.0
        %860 = vmatpush1.msra.mxu0 %v789
        %861 = vmatprep.subr.mxu0 0.0
        %862 = vmatpush1.msra.mxu0 %v788
        %863 = vmatprep.subr.mxu0 0.0
        %864 = vmatpush1.msra.mxu0 %v787
        %865 = vmatprep.subr.mxu0 0.0
        %866 = vmatpush2.msra.mxu0 0.0
        %867 = vmatprep.subr.mxu0 0.0
        %868 = vmatpush2.msra.mxu0 0.0
        %869 = vmatprep.subr.mxu0 0.0
        %870 = vmatpush2.msra.mxu0 0.0
        %871 = vmatprep.subr.mxu0 0.0
        %872 = vmatpush2.msra.mxu0 0.0
        %873 = vmatprep.subr.mxu0 0.0
        %874 = vmatpush2.msra.mxu0 0.0
        %875 = vmatprep.subr.mxu0 0.0
        %876 = vmatpush2.msra.mxu0 0.0
        %877 = vmatprep.subr.mxu0 0.0
        %878 = vmatpush2.msra.mxu0 0.0
        %879 = vmatprep.subr.mxu0 0.0
        %880 = vmatpush2.msra.mxu0 0.0
        %881 = vmatprep.subr.mxu0 0.0
        %882 = vmatpush2.msra.mxu0 0.0
        %883 = vmatprep.subr.mxu0 0.0
        %884 = vmatpush2.msra.mxu0 0.0
        %885 = vmatprep.subr.mxu0 0.0
        %886 = vmatpush2.msra.mxu0 0.0
        %887 = vmatprep.subr.mxu0 0.0
        %888 = vmatpush2.msra.mxu0 0.0
        %889 = vmatprep.subr.mxu0 0.0
        %890 = vmatpush2.msra.mxu0 0.0
        %891 = vmatprep.subr.mxu0 0.0
        %892 = vmatpush2.msra.mxu0 0.0
        %893 = vmatprep.subr.mxu0 0.0
        %894 = vmatpush2.msra.mxu0 0.0
        %895 = vmatprep.subr.mxu0 0.0
        %896 = vmatpush2.msra.mxu0 0.0
        %897 = vmatprep.mubr.f32.mxu0 0.0
        %898 = vmatmul.mubr.f32.gmra.mxu0 %v822
        %v899 = vpop.f32.mrf.mxu0
        %v900 = vadd.f32 %v804, %v899
        %v901 = vpop.f32.mrf.mxu0
        %902 = vmatprep.mubr.f32.mxu0 0.0
        %903 = vmatmul.mubr.f32.gmra.mxu0 %v825
        %v904 = vpop.f32.mrf.mxu0
        %v905 = vadd.f32 %v809, %v904
        %v906 = vpop.f32.mrf.mxu0
        %907 = vmatprep.mubr.f32.mxu0 0.0
        %908 = vmatmul.mubr.f32.gmra.mxu0 %v828
        %v909 = vpop.f32.mrf.mxu0
        %v910 = vadd.f32 %v814, %v909
        %v911 = vpop.f32.mrf.mxu0
        %912 = vmatprep.mubr.f32.mxu0 0.0
        %913 = vmatmul.mubr.f32.gmra.mxu0 %v831
        %v914 = vpop.f32.mrf.mxu0
        %v915 = vadd.f32 %v819, %v914
        %v916 = vpop.f32.mrf.mxu0
        %917 = vdwg.mxu0
        %v918 = vmax.f32 %v900, 0.0
        %v919 = vmax.f32 %v905, 0.0
        %v920 = vmax.f32 %v910, 0.0
        %v921 = vmax.f32 %v915, 0.0
        %s922 = scalar_lea.vmem %s4, 64
        %v923 = vld [vmem:[%s922] sm:$0xff]
        %v924 = vld [vmem:[%s922 + $0x8] sm:$0xff]
        %v925 = vld [vmem:[%s922 + $0x10] sm:$0xff]
        %v926 = vld [vmem:[%s922 + $0x18] sm:$0xff]
        %s927 = scalar_lea.vmem %s5, 64
        %v928 = vld [vmem:[%s927] sm:$0xff]
        %v929 = vld [vmem:[%s927 + $0x8] sm:$0xff]
        %v930 = vld [vmem:[%s927 + $0x10] sm:$0xff]
        %v931 = vld [vmem:[%s927 + $0x18] sm:$0xff]
        %933 = vset.pattern.permute.xlu0 0
        %934 = vperm.xlu0 %933, %v928
        %v935 = vpop.permute.xlu0 %934
        %938 = vset.pattern.permute.xlu0 0
        %939 = vperm.xlu0 %938, %v929
        %v940 = vpop.permute.xlu0 %939
        %943 = vset.pattern.permute.xlu0 0
        %944 = vperm.xlu0 %943, %v930
        %v945 = vpop.permute.xlu0 %944
        %948 = vset.pattern.permute.xlu0 0
        %949 = vperm.xlu0 %948, %v931
        %v950 = vpop.permute.xlu0 %949
        %v953 = vsel %vm689, %v923, 0
        %v956 = vsel %vm689, %v924, 0
        %v959 = vsel %vm689, %v925, 0
        %v962 = vsel %vm689, %v926, 0
        %964 = vmatprep.subr.mxu0 0.0
        %965 = vmatpush1.msra.mxu0 0.0
        %966 = vmatprep.subr.mxu0 0.0
        %967 = vmatpush1.msra.mxu0 0.0
        %968 = vmatprep.subr.mxu0 0.0
        %969 = vmatpush1.msra.mxu0 0.0
        %970 = vmatprep.subr.mxu0 0.0
        %971 = vmatpush1.msra.mxu0 0.0
        %972 = vmatprep.subr.mxu0 0.0
        %973 = vmatpush1.msra.mxu0 0.0
        %974 = vmatprep.subr.mxu0 0.0
        %975 = vmatpush1.msra.mxu0 0.0
        %976 = vmatprep.subr.mxu0 0.0
        %977 = vmatpush1.msra.mxu0 0.0
        %978 = vmatprep.subr.mxu0 0.0
        %979 = vmatpush1.msra.mxu0 0.0
        %980 = vmatprep.subr.mxu0 0.0
        %981 = vmatpush1.msra.mxu0 0.0
        %982 = vmatprep.subr.mxu0 0.0
        %983 = vmatpush1.msra.mxu0 0.0
        %984 = vmatprep.subr.mxu0 0.0
        %985 = vmatpush1.msra.mxu0 0.0
        %986 = vmatprep.subr.mxu0 0.0
        %987 = vmatpush1.msra.mxu0 0.0
        %988 = vmatprep.subr.mxu0 0.0
        %989 = vmatpush1.msra.mxu0 %v921
        %990 = vmatprep.subr.mxu0 0.0
        %991 = vmatpush1.msra.mxu0 %v920
        %992 = vmatprep.subr.mxu0 0.0
        %993 = vmatpush1.msra.mxu0 %v919
        %994 = vmatprep.subr.mxu0 0.0
        %995 = vmatpush1.msra.mxu0 %v918
        %996 = vmatprep.subr.mxu0 0.0
        %997 = vmatpush2.msra.mxu0 0.0
        %998 = vmatprep.subr.mxu0 0.0
        %999 = vmatpush2.msra.mxu0 0.0
        %1000 = vmatprep.subr.mxu0 0.0
        %1001 = vmatpush2.msra.mxu0 0.0
        %1002 = vmatprep.subr.mxu0 0.0
        %1003 = vmatpush2.msra.mxu0 0.0
        %1004 = vmatprep.subr.mxu0 0.0
        %1005 = vmatpush2.msra.mxu0 0.0
        %1006 = vmatprep.subr.mxu0 0.0
        %1007 = vmatpush2.msra.mxu0 0.0
        %1008 = vmatprep.subr.mxu0 0.0
        %1009 = vmatpush2.msra.mxu0 0.0
        %1010 = vmatprep.subr.mxu0 0.0
        %1011 = vmatpush2.msra.mxu0 0.0
        %1012 = vmatprep.subr.mxu0 0.0
        %1013 = vmatpush2.msra.mxu0 0.0
        %1014 = vmatprep.subr.mxu0 0.0
        %1015 = vmatpush2.msra.mxu0 0.0
        %1016 = vmatprep.subr.mxu0 0.0
        %1017 = vmatpush2.msra.mxu0 0.0
        %1018 = vmatprep.subr.mxu0 0.0
        %1019 = vmatpush2.msra.mxu0 0.0
        %1020 = vmatprep.subr.mxu0 0.0
        %1021 = vmatpush2.msra.mxu0 0.0
        %1022 = vmatprep.subr.mxu0 0.0
        %1023 = vmatpush2.msra.mxu0 0.0
        %1024 = vmatprep.subr.mxu0 0.0
        %1025 = vmatpush2.msra.mxu0 0.0
        %1026 = vmatprep.subr.mxu0 0.0
        %1027 = vmatpush2.msra.mxu0 0.0
        %1028 = vmatprep.mubr.f32.mxu0 0.0
        %1029 = vmatmul.mubr.f32.gmra.mxu0 %v953
        %v1030 = vpop.f32.mrf.mxu0
        %v1031 = vadd.f32 %v935, %v1030
        %v1032 = vpop.f32.mrf.mxu0
        %1033 = vmatprep.mubr.f32.mxu0 0.0
        %1034 = vmatmul.mubr.f32.gmra.mxu0 %v956
        %v1035 = vpop.f32.mrf.mxu0
        %v1036 = vadd.f32 %v940, %v1035
        %v1037 = vpop.f32.mrf.mxu0
        %1038 = vmatprep.mubr.f32.mxu0 0.0
        %1039 = vmatmul.mubr.f32.gmra.mxu0 %v959
        %v1040 = vpop.f32.mrf.mxu0
        %v1041 = vadd.f32 %v945, %v1040
        %v1042 = vpop.f32.mrf.mxu0
        %1043 = vmatprep.mubr.f32.mxu0 0.0
        %1044 = vmatmul.mubr.f32.gmra.mxu0 %v962
        %v1045 = vpop.f32.mrf.mxu0
        %v1046 = vadd.f32 %v950, %v1045
        %v1047 = vpop.f32.mrf.mxu0
        %1048 = vdwg.mxu0
        %v1049 = vmax.f32 %v1031, 0.0
        %v1050 = vmax.f32 %v1036, 0.0
        %v1051 = vmax.f32 %v1041, 0.0
        %v1052 = vmax.f32 %v1046, 0.0
        %v1053 = vld [vmem:[%s6] sm:$0xff]
        %v1054 = vld [vmem:[%s6 + $0x8] sm:$0xff]
        %v1055 = vld [vmem:[%s6 + $0x10] sm:$0xff]
        %v1056 = vld [vmem:[%s6 + $0x18] sm:$0xff]
        %1058 = vset.pattern.permute.xlu0 0
        %1059 = vperm.xlu0 %1058, %v1053
        %v1060 = vpop.permute.xlu0 %1059
        %1063 = vset.pattern.permute.xlu0 0
        %1064 = vperm.xlu0 %1063, %v1054
        %v1065 = vpop.permute.xlu0 %1064
        %1068 = vset.pattern.permute.xlu0 0
        %1069 = vperm.xlu0 %1068, %v1055
        %v1070 = vpop.permute.xlu0 %1069
        %1073 = vset.pattern.permute.xlu0 0
        %1074 = vperm.xlu0 %1073, %v1056
        %v1075 = vpop.permute.xlu0 %1074
        %v1077 = vmul.f32 %v1049, %v1060
        %v1078 = vmul.f32 %v1050, %v1065
        %v1079 = vmul.f32 %v1051, %v1070
        %v1080 = vmul.f32 %v1052, %v1075
        %v1081 = vadd.f32 %v1077, %v1078
        %v1082 = vadd.f32 %v1081, %v1079
        %v1083 = vadd.f32 %v1082, %v1080
        %v1084 = vrot.slane %v1083, 4
        %v1085 = vadd.f32 %v1083, %v1084
        %v1086 = vrot.slane %v1085, 2
        %v1087 = vadd.f32 %v1085, %v1086
        %v1088 = vrot.slane %v1087, 1
        %v1089 = vadd.f32 %v1087, %v1088
        %s1090 = sld [smem:[#allocation2]]
        %v1091 = vstv %s1090
        %v1092 = vadd.f32 %v1089, %v1091
        %1093 = vst [vmem:[%s296] sm:$0x1] %v1092
        %s1094 = sand.u32 %s204, 1
        %s1095 = scalar_lea.sflag [#allocation4], %s1094
        %s1096 = sand.u32 %s204, 1
        %s1097 = scalar_lea.vmem [#allocation3], %s1096
        // Predicated region
        $region53: #{tpu_custom_call.1} parent=51 // pred_check
          %p1098 = pneg %p214
        $region54: #{tpu_custom_call.1} parent=51 // pred_check_branch
          %1100 = sbr.rel (%p1098) target = $region56
        $region55: #{tpu_custom_call.1} parent=51 // pred_region
          %s1102 = ssub.s32 16, 16
          %1103 = vsyncadd %s1095, %s1102
          %s1104 = smul.addr %s23, 16
          %s1105 = scalar_lea.hbm %s8, %s1104
          %s1107 = sshll.u32 %s1097, 4
          %s1108 = int_to_ptr.vmem [resolvable:$true] %s1107
          %1110 = dma.vmem_to_hbm [thread:$0]  %s1108, 16, %s1105, %s1095
        $region56: #{tpu_custom_call.1} parent=51 // pred_fallthru
          _
      $region52: #{tpu_custom_call.1} parent=5 // pred_fallthru
        _
      %p1111 = scmp.le.s32.totalorder 2, %s18
      // Predicated region
      $region57: #{tpu_custom_call.1} parent=5 // pred_check
        %p1112 = pneg %p1111
      $region58: #{tpu_custom_call.1} parent=5 // pred_check_branch
        %1114 = sbr.rel (%p1112) target = $region60
      $region59: #{tpu_custom_call.1} parent=5 // pred_region
        %s1115 = ssub.s32 %s18, 2
        // Predicated region
        $region61: #{tpu_custom_call.1} parent=59 // pred_check
          %p1116 = pneg %p220
        $region62: #{tpu_custom_call.1} parent=59 // pred_check_branch
          %1118 = sbr.rel (%p1116) target = $region64
        $region63: #{tpu_custom_call.1} parent=59 // pred_region
          %s1119 = sand.u32 %s205, 1
          %s1120 = scalar_lea.sflag [#allocation4], %s1119
          %s1121 = sand.u32 %s205, 1
          %s1122 = scalar_lea.vmem [#allocation3], %s1121
          %1123 = dma.done %s1120, 16
        $region64: #{tpu_custom_call.1} parent=59 // pred_fallthru
          _
      $region60: #{tpu_custom_call.1} parent=5 // pred_fallthru
        _
    $region6: #{tpu_custom_call.1} parent=1 // loop_footer
      %s22 = sadd.s32 1, %s18
    $region7: #{tpu_custom_call.1} parent=1 // loop_footer_branch
      %17 = sbr.rel target = $region3
    $region8: #{tpu_custom_call.1} parent=1 // loop_exit
      _
    %1124 = vsyncpa [#allocation4], 1
    %s1125 = scalar_lea.sflag [#allocation4], 1
    %1126 = vsyncpa %s1125, 1

</llo_original>
